<compile_context>
chip_gen: v5e
topology: v5e:2x2
jax: 0.10.0
libtpu: 0.0.40
codegen_flags: <defaults>
</compile_context>

<pallas_src>
import jax
import jax.numpy as jnp
from jax.experimental import pallas as pl
from jax.experimental.pallas import tpu as pltpu

_LANES = 128


def _bce_dice_stats_kernel(x_ref, t_ref, out_ref,
                           acc_bce, acc_inter, acc_p, acc_t):
    """Accumulates per-(sample, lane) partial statistics over D-chunks.

    Grid: (sample i, chunk c).  Blocks:
      x_ref, t_ref : (1, TR, 128) tile of sample i, chunk c
      out_ref      : (1, 8, 128) per-sample stats slab
                     rows 0..3 = lane-partial [bce_sum, intersection, sum(probs), sum(t)]
    """
    c = pl.program_id(1)

    @pl.when(c == 0)
    def _init():
        acc_bce[...] = jnp.zeros_like(acc_bce)
        acc_inter[...] = jnp.zeros_like(acc_inter)
        acc_p[...] = jnp.zeros_like(acc_p)
        acc_t[...] = jnp.zeros_like(acc_t)

    # Widen in-register (inputs streamed in native dtype).
    x = x_ref[0].astype(jnp.float32)          # (TR, 128)
    t = t_ref[0].astype(jnp.float32)          # (TR, 128)

    # One shared transcendental for BCE and sigmoid.
    e = jnp.exp(-jnp.abs(x))                  # exp(-|x|)
    denom = 1.0 + e

    # Numerically stable BCE-with-logits: max(x,0) - x*t + log(1 + exp(-|x|))
    bce = jnp.maximum(x, 0.0) - x * t + jnp.log(denom)

    # sigmoid(x) = where(x>=0, 1, e) / (1 + e); approx reciprocal (EUP-cheap)
    # refined by one Newton-Raphson step on the VPU for full f32 accuracy.
    r = pl.reciprocal(denom, approx=True)
    r = r * (2.0 - denom * r)
    probs = jnp.where(x >= 0.0, 1.0, e) * r

    # Pure VPU element-wise accumulation; no cross-lane work per step.
    acc_bce[...] += bce
    acc_inter[...] += probs * t
    acc_p[...] += probs
    acc_t[...] += t

    @pl.when(c == pl.num_programs(1) - 1)
    def _finalize():
        # One sublane reduce per statistic, once per sample.  Cross-lane sums are
        # done in the wrapper on the lane-dense output slab.
        out_ref[0, 0:1, :] = jnp.sum(acc_bce[...], axis=0, keepdims=True)
        out_ref[0, 1:2, :] = jnp.sum(acc_inter[...], axis=0, keepdims=True)
        out_ref[0, 2:3, :] = jnp.sum(acc_p[...], axis=0, keepdims=True)
        out_ref[0, 3:4, :] = jnp.sum(acc_t[...], axis=0, keepdims=True)
        out_ref[0, 4:8, :] = jnp.zeros((4, _LANES), jnp.float32)


def bce_dice_loss(logits, targets, alpha=0.5, beta=0.5, block_rows=512):
    """alpha * BCEWithLogitsLoss(logits, targets) + beta * SoftDiceLoss(logits, targets)."""
    assert logits.shape == targets.shape
    n = logits.shape[0]
    x = logits.reshape(n, -1)                 # native dtype, no up-cast here
    t = targets.reshape(n, -1)
    d = x.shape[1]

    # Fold each sample's D onto (rows, 128) so sublanes are fully used; pad D so the
    # row count is a multiple of the tile rows.  Padding logits with -100 and targets
    # with 0 contributes (to f32 precision) nothing to any of the accumulated sums.
    rows = (d + _LANES - 1) // _LANES
    tr = min(block_rows, ((rows + 7) // 8) * 8)          # tile rows (multiple of 8)
    rows_pad = ((rows + tr - 1) // tr) * tr
    d_pad = rows_pad * _LANES
    if d_pad != d:
        x = jnp.pad(x, ((0, 0), (0, d_pad - d)), constant_values=-100.0)
        t = jnp.pad(t, ((0, 0), (0, d_pad - d)), constant_values=0)
    x = x.reshape(n, rows_pad, _LANES)
    t = t.reshape(n, rows_pad, _LANES)
    num_chunks = rows_pad // tr

    stats_slab = pl.pallas_call(
        _bce_dice_stats_kernel,
        out_shape=jax.ShapeDtypeStruct((n, 8, _LANES), jnp.float32),
        grid_spec=pltpu.PrefetchScalarGridSpec(
            num_scalar_prefetch=0,
            grid=(n, num_chunks),
            in_specs=[
                pl.BlockSpec((1, tr, _LANES), lambda i, c: (i, c, 0)),
                pl.BlockSpec((1, tr, _LANES), lambda i, c: (i, c, 0)),
            ],
            out_specs=pl.BlockSpec((1, 8, _LANES), lambda i, c: (i, 0, 0)),
            scratch_shapes=[pltpu.VMEM((tr, _LANES), jnp.float32)] * 4,
        ),
        compiler_params=pltpu.CompilerParams(
            dimension_semantics=("parallel", "arbitrary"),
            vmem_limit_bytes=32 * 1024 * 1024,
        ),
    )(x, t)

    # Tiny scalar epilogue in JAX: cross-lane reduce of the per-sample stats slab and
    # the final means / alpha-beta combine.
    stats = jnp.sum(stats_slab[:, :4, :], axis=-1)        # (N, 4)
    bce_sum, inter, s1, s2 = stats[:, 0], stats[:, 1], stats[:, 2], stats[:, 3]

    bce = jnp.sum(bce_sum) / jnp.float32(n * d)            # mean over true N*D
    smooth = jnp.float32(1.0)
    score = 2.0 * (inter + smooth) / (s1 + s2 + smooth)
    dice = 1.0 - jnp.sum(score) / jnp.float32(n)
    return jnp.float32(alpha) * bce + jnp.float32(beta) * dice


def _reference(logits, targets, alpha=0.5, beta=0.5):
    x = logits.reshape(logits.shape[0], -1).astype(jnp.float32)
    t = targets.reshape(targets.shape[0], -1).astype(jnp.float32)
    bce = jnp.mean(jnp.maximum(x, 0.0) - x * t + jnp.log1p(jnp.exp(-jnp.abs(x))))
    p = jax.nn.sigmoid(x)
    score = 2.0 * (jnp.sum(p * t, 1) + 1.0) / (jnp.sum(p, 1) + jnp.sum(t, 1) + 1.0)
    dice = 1.0 - jnp.mean(score)
    return alpha * bce + beta * dice


if __name__ == "__main__":
    key = jax.random.PRNGKey(0)
    k1, k2 = jax.random.split(key)
    # NCHW, like PyTorch conv outputs: batch=2, channels=4, spatial=16x16
    logits = jax.random.normal(k1, (2, 4, 16, 16), dtype=jnp.float32)
    targets = (jax.random.uniform(k2, (2, 4, 16, 16)) > 0.5).astype(jnp.float32)

    loss = bce_dice_loss(logits, targets, alpha=0.5, beta=0.5)
    loss = jax.block_until_ready(loss)

    ref = _reference(logits, targets)
    assert jnp.allclose(loss, ref, atol=1e-4, rtol=1e-4), (loss, ref)
    print("KERNEL_OK")
</pallas_src>

<mosaic_0001>
module attributes {stable_mosaic.version = 11 : i64} {
  func.func @_bce_dice_stats_kernel(%arg0: i32, %arg1: i32, %arg2: memref<1x8x128xf32, #tpu.memory_space<vmem>>, %arg3: memref<1x8x128xf32, #tpu.memory_space<vmem>>, %arg4: memref<1x8x128xf32, #tpu.memory_space<vmem>>, %arg5: memref<8x128xf32, #tpu.memory_space<vmem>>, %arg6: memref<8x128xf32, #tpu.memory_space<vmem>>, %arg7: memref<8x128xf32, #tpu.memory_space<vmem>>, %arg8: memref<8x128xf32, #tpu.memory_space<vmem>>) attributes {dimension_semantics = [#tpu.dimension_semantics<parallel>, #tpu.dimension_semantics<arbitrary>], iteration_bounds = array<i64: 2, 1>, scalar_prefetch = 0 : i64, scratch_operands = 4 : i64, tpu.core_type = #tpu.core_type<tc>, window_params = [{transform_indices = @transform_0, window_bounds = array<i64: 1, 8, 128>}, {transform_indices = @transform_1, window_bounds = array<i64: 1, 8, 128>}, {transform_indices = @transform_2, window_bounds = array<i64: 1, 8, 128>}]} {
    %c0_i32 = arith.constant 0 : i32
    %0 = arith.cmpi eq, %arg1, %c0_i32 : i32
    %1 = arith.extui %0 : i1 to i32
    %c0_i32_0 = arith.constant 0 : i32
    %2 = arith.cmpi ne, %1, %c0_i32_0 : i32
    scf.if %2 {
      %cst_29 = arith.constant 0.000000e+00 : f32
      %45 = vector.broadcast %cst_29 : f32 to vector<8x128xf32>
      %c0_30 = arith.constant 0 : index
      %c0_31 = arith.constant 0 : index
      %46 = vector.load %arg5[%c0_30, %c0_31] : memref<8x128xf32, #tpu.memory_space<vmem>>, vector<8x128xf32>
      tpu.vector_store %arg5[%c0_30, %c0_31], %45 {strides = array<i32>} : memref<8x128xf32, #tpu.memory_space<vmem>>, vector<8x128xf32>,
      %cst_32 = arith.constant 0.000000e+00 : f32
      %47 = vector.broadcast %cst_32 : f32 to vector<8x128xf32>
      %c0_33 = arith.constant 0 : index
      %c0_34 = arith.constant 0 : index
      %48 = vector.load %arg6[%c0_33, %c0_34] : memref<8x128xf32, #tpu.memory_space<vmem>>, vector<8x128xf32>
      tpu.vector_store %arg6[%c0_33, %c0_34], %47 {strides = array<i32>} : memref<8x128xf32, #tpu.memory_space<vmem>>, vector<8x128xf32>,
      %cst_35 = arith.constant 0.000000e+00 : f32
      %49 = vector.broadcast %cst_35 : f32 to vector<8x128xf32>
      %c0_36 = arith.constant 0 : index
      %c0_37 = arith.constant 0 : index
      %50 = vector.load %arg7[%c0_36, %c0_37] : memref<8x128xf32, #tpu.memory_space<vmem>>, vector<8x128xf32>
      tpu.vector_store %arg7[%c0_36, %c0_37], %49 {strides = array<i32>} : memref<8x128xf32, #tpu.memory_space<vmem>>, vector<8x128xf32>,
      %cst_38 = arith.constant 0.000000e+00 : f32
      %51 = vector.broadcast %cst_38 : f32 to vector<8x128xf32>
      %c0_39 = arith.constant 0 : index
      %c0_40 = arith.constant 0 : index
      %52 = vector.load %arg8[%c0_39, %c0_40] : memref<8x128xf32, #tpu.memory_space<vmem>>, vector<8x128xf32>
      tpu.vector_store %arg8[%c0_39, %c0_40], %51 {strides = array<i32>} : memref<8x128xf32, #tpu.memory_space<vmem>>, vector<8x128xf32>,
    } else {
    }
    %c0 = arith.constant 0 : index
    %c0_1 = arith.constant 0 : index
    %c0_2 = arith.constant 0 : index
    %3 = vector.load %arg2[%c0, %c0_1, %c0_2] : memref<1x8x128xf32, #tpu.memory_space<vmem>>, vector<1x8x128xf32>
    %4 = vector.shape_cast %3 : vector<1x8x128xf32> to vector<8x128xf32>
    %c0_3 = arith.constant 0 : index
    %c0_4 = arith.constant 0 : index
    %c0_5 = arith.constant 0 : index
    %5 = vector.load %arg3[%c0_3, %c0_4, %c0_5] : memref<1x8x128xf32, #tpu.memory_space<vmem>>, vector<1x8x128xf32>
    %6 = vector.shape_cast %5 : vector<1x8x128xf32> to vector<8x128xf32>
    %7 = math.absf %4 : vector<8x128xf32>
    %cst = arith.constant 0.000000e+00 : f32
    %8 = vector.broadcast %cst : f32 to vector<8x128xf32>
    %9 = arith.subf %8, %7 : vector<8x128xf32>
    %10 = math.exp %9 : vector<8x128xf32>
    %cst_6 = arith.constant 1.000000e+00 : f32
    %11 = vector.broadcast %cst_6 : f32 to vector<8x128xf32>
    %12 = arith.addf %11, %10 : vector<8x128xf32>
    %cst_7 = arith.constant 0.000000e+00 : f32
    %13 = vector.broadcast %cst_7 : f32 to vector<8x128xf32>
    %14 = arith.maximumf %4, %13 : vector<8x128xf32>
    %15 = arith.mulf %4, %6 : vector<8x128xf32>
    %16 = arith.subf %14, %15 : vector<8x128xf32>
    %17 = math.log %12 : vector<8x128xf32>
    %18 = arith.addf %16, %17 : vector<8x128xf32>
    %19 = tpu.reciprocal %12 {approx = true} : vector<8x128xf32> -> vector<8x128xf32>
    %20 = arith.mulf %12, %19 : vector<8x128xf32>
    %cst_8 = arith.constant 2.000000e+00 : f32
    %21 = vector.broadcast %cst_8 : f32 to vector<8x128xf32>
    %22 = arith.subf %21, %20 : vector<8x128xf32>
    %23 = arith.mulf %19, %22 : vector<8x128xf32>
    %cst_9 = arith.constant 0.000000e+00 : f32
    %24 = vector.broadcast %cst_9 : f32 to vector<8x128xf32>
    %25 = arith.cmpf oge, %4, %24 : vector<8x128xf32>
    %cst_10 = arith.constant 1.000000e+00 : f32
    %26 = vector.broadcast %cst_10 : f32 to vector<8x128xf32>
    %27 = arith.select %25, %26, %10 : vector<8x128xi1>, vector<8x128xf32>
    %28 = arith.mulf %27, %23 : vector<8x128xf32>
    %c0_11 = arith.constant 0 : index
    %c0_12 = arith.constant 0 : index
    %29 = vector.load %arg5[%c0_11, %c0_12] : memref<8x128xf32, #tpu.memory_space<vmem>>, vector<8x128xf32>
    %30 = arith.addf %29, %18 : vector<8x128xf32>
    %c0_13 = arith.constant 0 : index
    %c0_14 = arith.constant 0 : index
    %31 = vector.load %arg5[%c0_13, %c0_14] : memref<8x128xf32, #tpu.memory_space<vmem>>, vector<8x128xf32>
    tpu.vector_store %arg5[%c0_13, %c0_14], %30 {strides = array<i32>} : memref<8x128xf32, #tpu.memory_space<vmem>>, vector<8x128xf32>,
    %c0_15 = arith.constant 0 : index
    %c0_16 = arith.constant 0 : index
    %32 = vector.load %arg6[%c0_15, %c0_16] : memref<8x128xf32, #tpu.memory_space<vmem>>, vector<8x128xf32>
    %33 = arith.mulf %28, %6 : vector<8x128xf32>
    %34 = arith.addf %32, %33 : vector<8x128xf32>
    %c0_17 = arith.constant 0 : index
    %c0_18 = arith.constant 0 : index
    %35 = vector.load %arg6[%c0_17, %c0_18] : memref<8x128xf32, #tpu.memory_space<vmem>>, vector<8x128xf32>
    tpu.vector_store %arg6[%c0_17, %c0_18], %34 {strides = array<i32>} : memref<8x128xf32, #tpu.memory_space<vmem>>, vector<8x128xf32>,
    %c0_19 = arith.constant 0 : index
    %c0_20 = arith.constant 0 : index
    %36 = vector.load %arg7[%c0_19, %c0_20] : memref<8x128xf32, #tpu.memory_space<vmem>>, vector<8x128xf32>
    %37 = arith.addf %36, %28 : vector<8x128xf32>
    %c0_21 = arith.constant 0 : index
    %c0_22 = arith.constant 0 : index
    %38 = vector.load %arg7[%c0_21, %c0_22] : memref<8x128xf32, #tpu.memory_space<vmem>>, vector<8x128xf32>
    tpu.vector_store %arg7[%c0_21, %c0_22], %37 {strides = array<i32>} : memref<8x128xf32, #tpu.memory_space<vmem>>, vector<8x128xf32>,
    %c0_23 = arith.constant 0 : index
    %c0_24 = arith.constant 0 : index
    %39 = vector.load %arg8[%c0_23, %c0_24] : memref<8x128xf32, #tpu.memory_space<vmem>>, vector<8x128xf32>
    %40 = arith.addf %39, %6 : vector<8x128xf32>
    %c0_25 = arith.constant 0 : index
    %c0_26 = arith.constant 0 : index
    %41 = vector.load %arg8[%c0_25, %c0_26] : memref<8x128xf32, #tpu.memory_space<vmem>>, vector<8x128xf32>
    tpu.vector_store %arg8[%c0_25, %c0_26], %40 {strides = array<i32>} : memref<8x128xf32, #tpu.memory_space<vmem>>, vector<8x128xf32>,
    %c0_i32_27 = arith.constant 0 : i32
    %42 = arith.cmpi eq, %arg1, %c0_i32_27 : i32
    %43 = arith.extui %42 : i1 to i32
    %c0_i32_28 = arith.constant 0 : i32
    %44 = arith.cmpi ne, %43, %c0_i32_28 : i32
    scf.if %44 {
      %c0_29 = arith.constant 0 : index
      %c0_30 = arith.constant 0 : index
      %45 = vector.load %arg5[%c0_29, %c0_30] : memref<8x128xf32, #tpu.memory_space<vmem>>, vector<8x128xf32>
      %cst_31 = arith.constant dense<0.000000e+00> : vector<128xf32>
      %46 = vector.multi_reduction <add>, %45, %cst_31 [0] : vector<8x128xf32> to vector<128xf32>
      %47 = vector.shape_cast %46 : vector<128xf32> to vector<1x128xf32>
      %c0_32 = arith.constant 0 : index
      %c0_33 = arith.constant 0 : index
      %c0_34 = arith.constant 0 : index
      %48 = vector.load %arg4[%c0_32, %c0_33, %c0_34] : memref<1x8x128xf32, #tpu.memory_space<vmem>>, vector<1x1x128xf32>
      %49 = vector.shape_cast %48 : vector<1x1x128xf32> to vector<1x128xf32>
      %50 = vector.shape_cast %47 : vector<1x128xf32> to vector<1x1x128xf32>
      tpu.vector_store %arg4[%c0_32, %c0_33, %c0_34], %50 {strides = array<i32>} : memref<1x8x128xf32, #tpu.memory_space<vmem>>, vector<1x1x128xf32>,
      %c0_35 = arith.constant 0 : index
      %c0_36 = arith.constant 0 : index
      %51 = vector.load %arg6[%c0_35, %c0_36] : memref<8x128xf32, #tpu.memory_space<vmem>>, vector<8x128xf32>
      %cst_37 = arith.constant dense<0.000000e+00> : vector<128xf32>
      %52 = vector.multi_reduction <add>, %51, %cst_37 [0] : vector<8x128xf32> to vector<128xf32>
      %53 = vector.shape_cast %52 : vector<128xf32> to vector<1x128xf32>
      %c0_38 = arith.constant 0 : index
      %c1 = arith.constant 1 : index
      %c0_39 = arith.constant 0 : index
      %54 = vector.load %arg4[%c0_38, %c1, %c0_39] : memref<1x8x128xf32, #tpu.memory_space<vmem>>, vector<1x1x128xf32>
      %55 = vector.shape_cast %54 : vector<1x1x128xf32> to vector<1x128xf32>
      %56 = vector.shape_cast %53 : vector<1x128xf32> to vector<1x1x128xf32>
      tpu.vector_store %arg4[%c0_38, %c1, %c0_39], %56 {strides = array<i32>} : memref<1x8x128xf32, #tpu.memory_space<vmem>>, vector<1x1x128xf32>,
      %c0_40 = arith.constant 0 : index
      %c0_41 = arith.constant 0 : index
      %57 = vector.load %arg7[%c0_40, %c0_41] : memref<8x128xf32, #tpu.memory_space<vmem>>, vector<8x128xf32>
      %cst_42 = arith.constant dense<0.000000e+00> : vector<128xf32>
      %58 = vector.multi_reduction <add>, %57, %cst_42 [0] : vector<8x128xf32> to vector<128xf32>
      %59 = vector.shape_cast %58 : vector<128xf32> to vector<1x128xf32>
      %c0_43 = arith.constant 0 : index
      %c2 = arith.constant 2 : index
      %c0_44 = arith.constant 0 : index
      %60 = vector.load %arg4[%c0_43, %c2, %c0_44] : memref<1x8x128xf32, #tpu.memory_space<vmem>>, vector<1x1x128xf32>
      %61 = vector.shape_cast %60 : vector<1x1x128xf32> to vector<1x128xf32>
      %62 = vector.shape_cast %59 : vector<1x128xf32> to vector<1x1x128xf32>
      tpu.vector_store %arg4[%c0_43, %c2, %c0_44], %62 {strides = array<i32>} : memref<1x8x128xf32, #tpu.memory_space<vmem>>, vector<1x1x128xf32>,
      %c0_45 = arith.constant 0 : index
      %c0_46 = arith.constant 0 : index
      %63 = vector.load %arg8[%c0_45, %c0_46] : memref<8x128xf32, #tpu.memory_space<vmem>>, vector<8x128xf32>
      %cst_47 = arith.constant dense<0.000000e+00> : vector<128xf32>
      %64 = vector.multi_reduction <add>, %63, %cst_47 [0] : vector<8x128xf32> to vector<128xf32>
      %65 = vector.shape_cast %64 : vector<128xf32> to vector<1x128xf32>
      %c0_48 = arith.constant 0 : index
      %c3 = arith.constant 3 : index
      %c0_49 = arith.constant 0 : index
      %66 = vector.load %arg4[%c0_48, %c3, %c0_49] : memref<1x8x128xf32, #tpu.memory_space<vmem>>, vector<1x1x128xf32>
      %67 = vector.shape_cast %66 : vector<1x1x128xf32> to vector<1x128xf32>
      %68 = vector.shape_cast %65 : vector<1x128xf32> to vector<1x1x128xf32>
      tpu.vector_store %arg4[%c0_48, %c3, %c0_49], %68 {strides = array<i32>} : memref<1x8x128xf32, #tpu.memory_space<vmem>>, vector<1x1x128xf32>,
      %cst_50 = arith.constant 0.000000e+00 : f32
      %69 = vector.broadcast %cst_50 : f32 to vector<4x128xf32>
      %c0_51 = arith.constant 0 : index
      %c4 = arith.constant 4 : index
      %c0_52 = arith.constant 0 : index
      %70 = vector.load %arg4[%c0_51, %c4, %c0_52] : memref<1x8x128xf32, #tpu.memory_space<vmem>>, vector<1x4x128xf32>
      %71 = vector.shape_cast %70 : vector<1x4x128xf32> to vector<4x128xf32>
      %72 = vector.shape_cast %69 : vector<4x128xf32> to vector<1x4x128xf32>
      tpu.vector_store %arg4[%c0_51, %c4, %c0_52], %72 {strides = array<i32>} : memref<1x8x128xf32, #tpu.memory_space<vmem>>, vector<1x4x128xf32>,
    } else {
    }
    return
  }
  func.func @transform_0(%arg0: i32, %arg1: i32) -> (i32, i32, i32) {
    %c0_i32 = arith.constant 0 : i32
    %c0_i32_0 = arith.constant 0 : i32
    return %arg0, %arg1, %c0_i32 : i32, i32, i32
  }
  func.func @transform_1(%arg0: i32, %arg1: i32) -> (i32, i32, i32) {
    %c0_i32 = arith.constant 0 : i32
    %c0_i32_0 = arith.constant 0 : i32
    return %arg0, %arg1, %c0_i32 : i32, i32, i32
  }
  func.func @transform_2(%arg0: i32, %arg1: i32) -> (i32, i32, i32) {
    %c0_i32 = arith.constant 0 : i32
    %c0_i32_0 = arith.constant 0 : i32
    %c0_i32_1 = arith.constant 0 : i32
    return %arg0, %c0_i32, %c0_i32_0 : i32, i32, i32
  }
}

</mosaic_0001>

<llo_original>
// kernel: tpu_custom_call.1
$region0: #{tpu_custom_call.1}
  #allocation0 [shape = 'u32[]', space=smem, size = 0x4, offset = 0x4, fixed_abs, tag = 'smem constant byte address 0x4 - core index']
  #allocation1 [shape = 'u32[72,128]{1,0:T(1,128)}', space=vmem, size = 0x9000, scoped, tag = 'internal scratch']
  #allocation2 [shape = 'f32[8,128]{1,0:T(8,128)}', space=vmem, size = 0x1000, scoped, tag = 'scratch operand']
  #allocation3 [shape = 'f32[8,128]{1,0:T(8,128)}', space=vmem, size = 0x1000, scoped, tag = 'scratch operand']
  #allocation4 [shape = 'f32[8,128]{1,0:T(8,128)}', space=vmem, size = 0x1000, scoped, tag = 'scratch operand']
  #allocation5 [shape = 'f32[8,128]{1,0:T(8,128)}', space=vmem, size = 0x1000, scoped, tag = 'scratch operand']
  %s0 = inlined_call_operand.hbm [shape: f32[2,8,128], index: 0, kind: input, shape index: {}]
  %s1 = inlined_call_operand.hbm [shape: f32[2,8,128], index: 1, kind: input, shape index: {}]
  %s2 = inlined_call_operand.hbm [shape: f32[2,8,128], index: 2, kind: output, shape index: {}]
  %s3 = sld [smem:[#allocation0]]
  $region57: #{tpu_custom_call.1} parent=0
    _
  %s5 = ssub.s32 1, %s3
  %s6 = scalar_select 0, %s5, %s3
  $region1: #{tpu_custom_call.1} parent=0
    #allocation6 [shape = 'u8[8192]{0}', space=vmem, size = 0x2000, scoped, tag = 'input window, operand 0']
    #allocation7 [shape = 's32[2]{0}', space=sflag, size = 0x8, scoped, tag = 'scoped memory for tpu_custom_call.1']
    #allocation8 [shape = 's32[2]{0}', space=sflag, size = 0x8, scoped, tag = 'scoped memory for tpu_custom_call.1']
    #allocation9 [shape = 'u8[8192]{0}', space=vmem, size = 0x2000, scoped, tag = 'input window, operand 1']
    #allocation10 [shape = 's32[2]{0}', space=sflag, size = 0x8, scoped, tag = 'scoped memory for tpu_custom_call.1']
    #allocation11 [shape = 'u8[8192]{0}', space=vmem, size = 0x2000, scoped, tag = 'output window, operand 0']
    %7 = vsyncpa [#allocation7], 0
    %s8 = scalar_lea.sflag [#allocation7], 1
    %9 = vsyncpa %s8, 0
    %10 = vsyncpa [#allocation10], 0
    %s11 = scalar_lea.sflag [#allocation10], 1
    %12 = vsyncpa %s11, 0
    %13 = vsyncpa [#allocation8], 0
    %s14 = scalar_lea.sflag [#allocation8], 1
    %15 = vsyncpa %s14, 0
    loop: start=0, step=1, limit=4
    $region2: #{tpu_custom_call.1} parent=1 // loop_pre_header
      _
    $region3: #{tpu_custom_call.1} parent=1 // loop_header
      %s17 = sphi 0, %s21
      %p18 = scmp.ge.s32.totalorder %s17, 4
      %s24 = sphi 0, %s36
      %s25 = sphi 0, %s32
      %s26 = sphi 0, %s24
      %s27 = sphi 0, %s25
      %s28 = sphi 0, %s26
      %s29 = sphi 0, %s27
      %s41 = sphi 0, %s43
      %s44 = sphi 0, %s41
      %s45 = sphi 0, %s44
      %s61 = sphi 0, %s45
      %s69 = sphi 0, %s71
      %s72 = sphi 0, %s69
      %s73 = sphi 0, %s72
      %s89 = sphi 0, %s73
      %s95 = sphi 0, %s97
      %s98 = sphi 0, %s95
      %s99 = sphi 0, %s98
      %s115 = sphi 0, %s99
    $region4: #{tpu_custom_call.1} parent=1 // loop_header_branch
      %20 = sbr.rel (%p18) target = $region8
    $region5: #{tpu_custom_call.1} parent=1 // loop_body
      %s22 = ssub.s32 %s17, 1
      %s23 = ssub.s32 %s17, 2
      %s30 = sadd.s32 1, %s25
      %p31 = scmp.ge.s32.totalorder %s30, 1
      %s32 = scalar_select %p31, 0, %s30
      %s33 = sadd.s32 1, %s24
      %s34 = scalar_select %p31, %s33, %s24
      %p35 = scmp.ge.s32.totalorder %s34, 2
      %s36 = scalar_select %p35, 0, %s34
      %s37 = ssub.s32 %s24, %s36
      %s38 = ssub.s32 %s25, %s32
      %s39 = sor.u32 %s37, %s38
      %p40 = scmp.eq.s32.totalorder %s39, 0
      %s42 = sadd.s32 %s41, 1
      %s43 = scalar_select %p40, %s41, %s42
      %p46 = pneg %p40
      %p47 = scmp.eq.s32.totalorder %s17, 1
      %p48 = por %p46, %p47
      %p49 = scmp.ne.s32.totalorder %s41, %s44
      %p50 = scmp.eq.s32.totalorder %s17, 0
      %p51 = por %p49, %p50
      %p52 = scmp.ne.s32.totalorder %s41, %s44
      %p53 = scmp.eq.s32.totalorder %s22, 1
      %p54 = por %p52, %p53
      %p55 = scmp.ne.s32.totalorder %s44, %s45
      %p56 = scmp.eq.s32.totalorder %s22, 0
      %p57 = por %p55, %p56
      %p58 = scmp.ne.s32.totalorder %s44, %s45
      %p59 = scmp.eq.s32.totalorder %s23, 1
      %p60 = por %p58, %p59
      %p62 = scmp.ne.s32.totalorder %s45, %s61
      %p63 = scmp.eq.s32.totalorder %s23, 0
      %p64 = por %p62, %p63
      %s65 = ssub.s32 %s24, %s36
      %s66 = ssub.s32 %s25, %s32
      %s67 = sor.u32 %s65, %s66
      %p68 = scmp.eq.s32.totalorder %s67, 0
      %s70 = sadd.s32 %s69, 1
      %s71 = scalar_select %p68, %s69, %s70
      %p74 = pneg %p68
      %p75 = scmp.eq.s32.totalorder %s17, 1
      %p76 = por %p74, %p75
      %p77 = scmp.ne.s32.totalorder %s69, %s72
      %p78 = scmp.eq.s32.totalorder %s17, 0
      %p79 = por %p77, %p78
      %p80 = scmp.ne.s32.totalorder %s69, %s72
      %p81 = scmp.eq.s32.totalorder %s22, 1
      %p82 = por %p80, %p81
      %p83 = scmp.ne.s32.totalorder %s72, %s73
      %p84 = scmp.eq.s32.totalorder %s22, 0
      %p85 = por %p83, %p84
      %p86 = scmp.ne.s32.totalorder %s72, %s73
      %p87 = scmp.eq.s32.totalorder %s23, 1
      %p88 = por %p86, %p87
      %p90 = scmp.ne.s32.totalorder %s73, %s89
      %p91 = scmp.eq.s32.totalorder %s23, 0
      %p92 = por %p90, %p91
      %s93 = ssub.s32 %s24, %s36
      %p94 = scmp.eq.s32.totalorder %s93, 0
      %s96 = sadd.s32 %s95, 1
      %s97 = scalar_select %p94, %s95, %s96
      %p100 = pneg %p94
      %p101 = scmp.eq.s32.totalorder %s17, 1
      %p102 = por %p100, %p101
      %p103 = scmp.ne.s32.totalorder %s95, %s98
      %p104 = scmp.eq.s32.totalorder %s17, 0
      %p105 = por %p103, %p104
      %p106 = scmp.ne.s32.totalorder %s95, %s98
      %p107 = scmp.eq.s32.totalorder %s22, 1
      %p108 = por %p106, %p107
      %p109 = scmp.ne.s32.totalorder %s98, %s99
      %p110 = scmp.eq.s32.totalorder %s22, 0
      %p111 = por %p109, %p110
      %p112 = scmp.ne.s32.totalorder %s98, %s99
      %p113 = scmp.eq.s32.totalorder %s23, 1
      %p114 = por %p112, %p113
      %p116 = scmp.ne.s32.totalorder %s99, %s115
      %p117 = scmp.eq.s32.totalorder %s23, 0
      %p118 = por %p116, %p117
      %p119 = scmp.le.s32.totalorder 1, %s17
      %p120 = scmp.lt.s32.totalorder %s17, 3
      %p121 = pnand %p119, %p120
      %p122 = pneg %p121
      // Predicated region
      $region9: #{tpu_custom_call.1} parent=5 // pred_check
        _
      $region10: #{tpu_custom_call.1} parent=5 // pred_check_branch
        %124 = sbr.rel (%p121) target = $region12
      $region11: #{tpu_custom_call.1} parent=5 // pred_region
        %s125 = ssub.s32 %s17, 1
      $region12: #{tpu_custom_call.1} parent=5 // pred_fallthru
        _
      %p126 = scmp.lt.s32.totalorder %s17, 2
      // Predicated region
      $region13: #{tpu_custom_call.1} parent=5 // pred_check
        %p127 = pneg %p126
      $region14: #{tpu_custom_call.1} parent=5 // pred_check_branch
        %129 = sbr.rel (%p127) target = $region16
      $region15: #{tpu_custom_call.1} parent=5 // pred_region
        // Predicated region
        $region17: #{tpu_custom_call.1} parent=15 // pred_check
          %p130 = pneg %p51
        $region18: #{tpu_custom_call.1} parent=15 // pred_check_branch
          %132 = sbr.rel (%p130) target = $region20
        $region19: #{tpu_custom_call.1} parent=15 // pred_region
          %s133 = sand.u32 %s41, 1
          %s134 = scalar_lea.sflag [#allocation7], %s133
          %s135 = sand.u32 %s41, 1
          %s136 = smul.addr %s135, 8
          %s137 = scalar_lea.vmem [#allocation6], %s136
          %139 = vsyncadd %s134, 0
          %s140 = sadd.s32 %s25, %s24
          %s141 = smul.addr %s140, 8
          %s142 = scalar_lea.hbm %s0, %s141
          %s144 = sshll.u32 %s142, 4
          %s145 = int_to_ptr.hbm [resolvable:$true] %s144
          %s146 = sshll.u32 %s137, 4
          %s147 = int_to_ptr.vmem [resolvable:$true] %s146
          %149 = dma.hbm_to_vmem [thread:$0]  %s145, 128, %s147, %s134
        $region20: #{tpu_custom_call.1} parent=15 // pred_fallthru
          _
        // Predicated region
        $region21: #{tpu_custom_call.1} parent=15 // pred_check
          %p150 = pneg %p79
        $region22: #{tpu_custom_call.1} parent=15 // pred_check_branch
          %152 = sbr.rel (%p150) target = $region24
        $region23: #{tpu_custom_call.1} parent=15 // pred_region
          %s153 = sand.u32 %s69, 1
          %s154 = scalar_lea.sflag [#allocation10], %s153
          %s155 = sand.u32 %s69, 1
          %s156 = smul.addr %s155, 8
          %s157 = scalar_lea.vmem [#allocation9], %s156
          %159 = vsyncadd %s154, 0
          %s160 = sadd.s32 %s25, %s24
          %s161 = smul.addr %s160, 8
          %s162 = scalar_lea.hbm %s1, %s161
          %s164 = sshll.u32 %s162, 4
          %s165 = int_to_ptr.hbm [resolvable:$true] %s164
          %s166 = sshll.u32 %s157, 4
          %s167 = int_to_ptr.vmem [resolvable:$true] %s166
          %169 = dma.hbm_to_vmem [thread:$0]  %s165, 128, %s167, %s154
        $region24: #{tpu_custom_call.1} parent=15 // pred_fallthru
          _
      $region16: #{tpu_custom_call.1} parent=5 // pred_fallthru
        _
      %p170 = scmp.le.s32.totalorder 1, %s17
      %p171 = scmp.lt.s32.totalorder %s17, 3
      %p172 = pnand %p170, %p171
      %p173 = pneg %p172
      // Predicated region
      $region25: #{tpu_custom_call.1} parent=5 // pred_check
        _
      $region26: #{tpu_custom_call.1} parent=5 // pred_check_branch
        %175 = sbr.rel (%p172) target = $region28
      $region27: #{tpu_custom_call.1} parent=5 // pred_region
        %s176 = ssub.s32 %s17, 1
        %s177 = sand.u32 %s44, 1
        %s178 = scalar_lea.sflag [#allocation7], %s177
        %s179 = sand.u32 %s44, 1
        %s180 = smul.addr %s179, 8
        %s181 = scalar_lea.vmem [#allocation6], %s180
        // Predicated region
        $region29: #{tpu_custom_call.1} parent=27 // pred_check
          %p182 = pneg %p57
        $region30: #{tpu_custom_call.1} parent=27 // pred_check_branch
          %184 = sbr.rel (%p182) target = $region32
        $region31: #{tpu_custom_call.1} parent=27 // pred_region
          %186 = dma.done %s178, 128
        $region32: #{tpu_custom_call.1} parent=27 // pred_fallthru
          _
        %s187 = sand.u32 %s72, 1
        %s188 = scalar_lea.sflag [#allocation10], %s187
        %s189 = sand.u32 %s72, 1
        %s190 = smul.addr %s189, 8
        %s191 = scalar_lea.vmem [#allocation9], %s190
        // Predicated region
        $region33: #{tpu_custom_call.1} parent=27 // pred_check
          %p192 = pneg %p85
        $region34: #{tpu_custom_call.1} parent=27 // pred_check_branch
          %194 = sbr.rel (%p192) target = $region36
        $region35: #{tpu_custom_call.1} parent=27 // pred_region
          %196 = dma.done %s188, 128
        $region36: #{tpu_custom_call.1} parent=27 // pred_fallthru
          _
        %s197 = sand.u32 %s44, 1
        %s198 = scalar_lea.sflag [#allocation7], %s197
        %s199 = sand.u32 %s44, 1
        %s200 = smul.addr %s199, 8
        %s201 = scalar_lea.vmem [#allocation6], %s200
        %p202 = pneg %p57
        %p203 = pneg %p54
        %s204 = sand.u32 %s72, 1
        %s205 = scalar_lea.sflag [#allocation10], %s204
        %s206 = sand.u32 %s72, 1
        %s207 = smul.addr %s206, 8
        %s208 = scalar_lea.vmem [#allocation9], %s207
        %p209 = pneg %p85
        %p210 = pneg %p82
        %p211 = pneg %p111
        %p212 = pneg %p108
        %s213 = sand.u32 %s98, 1
        %s214 = scalar_lea.sflag [#allocation8], %s213
        %s215 = sand.u32 %s98, 1
        %s216 = smul.addr %s215, 8
        %s217 = scalar_lea.vmem [#allocation11], %s216
        %p218 = scmp.eq.s32.totalorder %s27, 0
        // Predicated region
        $region37: #{tpu_custom_call.1} parent=27 // pred_check
          %p219 = pneg %p218
        $region38: #{tpu_custom_call.1} parent=27 // pred_check_branch
          %221 = sbr.rel (%p219) target = $region40
        $region39: #{tpu_custom_call.1} parent=27 // pred_region
          %222 = vst [vmem:[#allocation2] sm:$0xff] 0.0
          %223 = vst [vmem:[#allocation3] sm:$0xff] 0.0
          %224 = vst [vmem:[#allocation4] sm:$0xff] 0.0
          %225 = vst [vmem:[#allocation5] sm:$0xff] 0.0
        $region40: #{tpu_custom_call.1} parent=27 // pred_fallthru
          _
        %v226 = vld [vmem:[%s181] sm:$0xff]
        %v227 = vld [vmem:[%s191] sm:$0xff]
        %v228 = vand.u32 2147483647, %v226
        %v229 = vsub.f32 0.0, %v228
        %v230 = vmul.f32 %v229, 1.442695
        %v231 = vpow.pop %v230
        %v232 = vadd.f32 %v231, 1.0
        %v233 = vmax.f32 %v226, 0.0
        %v234 = vmul.f32 %v226, %v227
        %v235 = vsub.f32 %v233, %v234
        %v236 = vlog2.pop %v232
        %v237 = vmul.f32 %v236, 0.6931472
        %v238 = vadd.f32 %v235, %v237
        %v239 = vrcp.pop %v232
        %v240 = vmul.f32 %v232, %v239
        %v241 = vsub.f32 2.0, %v240
        %v242 = vmul.f32 %v239, %v241
        %vm243 = vcmp.ge.f32.partialorder %v226, 0.0
        %v244 = vsel %vm243, 1.0, %v231
        %v245 = vmul.f32 %v244, %v242
        %v246 = vld [vmem:[#allocation2] sm:$0xff]
        %v247 = vadd.f32 %v246, %v238
        %248 = vst [vmem:[#allocation2] sm:$0xff] %v247
        %v249 = vld [vmem:[#allocation3] sm:$0xff]
        %v250 = vmul.f32 %v245, %v227
        %v251 = vadd.f32 %v249, %v250
        %252 = vst [vmem:[#allocation3] sm:$0xff] %v251
        %v253 = vld [vmem:[#allocation4] sm:$0xff]
        %v254 = vadd.f32 %v253, %v245
        %255 = vst [vmem:[#allocation4] sm:$0xff] %v254
        %v256 = vld [vmem:[#allocation5] sm:$0xff]
        %v257 = vadd.f32 %v256, %v227
        %258 = vst [vmem:[#allocation5] sm:$0xff] %v257
        // Predicated region
        $region41: #{tpu_custom_call.1} parent=27 // pred_check
          %p259 = pneg %p218
        $region42: #{tpu_custom_call.1} parent=27 // pred_check_branch
          %261 = sbr.rel (%p259) target = $region44
        $region43: #{tpu_custom_call.1} parent=27 // pred_region
          %v262 = vld [vmem:[#allocation2] sm:$0xff]
          %v263 = vrot.slane %v262, 4
          %v264 = vadd.f32 %v262, %v263
          %v265 = vrot.slane %v264, 2
          %v266 = vadd.f32 %v264, %v265
          %v267 = vrot.slane %v266, 1
          %v268 = vadd.f32 %v266, %v267
          %269 = vst [vmem:[%s217] sm:$0x1] %v268
          %v270 = vld [vmem:[#allocation3] sm:$0xff]
          %v271 = vrot.slane %v270, 4
          %v272 = vadd.f32 %v270, %v271
          %v273 = vrot.slane %v272, 2
          %v274 = vadd.f32 %v272, %v273
          %v275 = vrot.slane %v274, 1
          %v276 = vadd.f32 %v274, %v275
          %277 = vst [vmem:[%s217 + $0x1] sm:$0x1] %v276
          %v278 = vld [vmem:[#allocation4] sm:$0xff]
          %v279 = vrot.slane %v278, 4
          %v280 = vadd.f32 %v278, %v279
          %v281 = vrot.slane %v280, 2
          %v282 = vadd.f32 %v280, %v281
          %v283 = vrot.slane %v282, 1
          %v284 = vadd.f32 %v282, %v283
          %285 = vst [vmem:[%s217 + $0x2] sm:$0x1] %v284
          %v286 = vld [vmem:[#allocation5] sm:$0xff]
          %v287 = vrot.slane %v286, 4
          %v288 = vadd.f32 %v286, %v287
          %v289 = vrot.slane %v288, 2
          %v290 = vadd.f32 %v288, %v289
          %v291 = vrot.slane %v290, 1
          %v292 = vadd.f32 %v290, %v291
          %293 = vst [vmem:[%s217 + $0x3] sm:$0x1] %v292
          %294 = vst [vmem:[%s217 + $0x4] sm:$0xf] 0.0
        $region44: #{tpu_custom_call.1} parent=27 // pred_fallthru
          _
        %s295 = sand.u32 %s98, 1
        %s296 = scalar_lea.sflag [#allocation8], %s295
        %s297 = sand.u32 %s98, 1
        %s298 = smul.addr %s297, 8
        %s299 = scalar_lea.vmem [#allocation11], %s298
        // Predicated region
        $region45: #{tpu_custom_call.1} parent=27 // pred_check
          %p300 = pneg %p108
        $region46: #{tpu_custom_call.1} parent=27 // pred_check_branch
          %302 = sbr.rel (%p300) target = $region48
        $region47: #{tpu_custom_call.1} parent=27 // pred_region
          %304 = vsyncadd %s296, 0
          %s305 = smul.addr %s26, 8
          %s306 = scalar_lea.hbm %s2, %s305
          %s308 = sshll.u32 %s299, 4
          %s309 = int_to_ptr.vmem [resolvable:$true] %s308
          %s310 = sshll.u32 %s306, 4
          %s311 = int_to_ptr.hbm [resolvable:$true] %s310
          %313 = dma.vmem_to_hbm [thread:$0]  %s309, 128, %s311, %s296
        $region48: #{tpu_custom_call.1} parent=27 // pred_fallthru
          _
      $region28: #{tpu_custom_call.1} parent=5 // pred_fallthru
        _
      %p314 = scmp.le.s32.totalorder 2, %s17
      // Predicated region
      $region49: #{tpu_custom_call.1} parent=5 // pred_check
        %p315 = pneg %p314
      $region50: #{tpu_custom_call.1} parent=5 // pred_check_branch
        %317 = sbr.rel (%p315) target = $region52
      $region51: #{tpu_custom_call.1} parent=5 // pred_region
        %s318 = ssub.s32 %s17, 2
        // Predicated region
        $region53: #{tpu_custom_call.1} parent=51 // pred_check
          %p319 = pneg %p114
        $region54: #{tpu_custom_call.1} parent=51 // pred_check_branch
          %321 = sbr.rel (%p319) target = $region56
        $region55: #{tpu_custom_call.1} parent=51 // pred_region
          %s322 = sand.u32 %s99, 1
          %s323 = scalar_lea.sflag [#allocation8], %s322
          %s324 = sand.u32 %s99, 1
          %s325 = smul.addr %s324, 8
          %s326 = scalar_lea.vmem [#allocation11], %s325
          %328 = dma.done %s323, 128
        $region56: #{tpu_custom_call.1} parent=51 // pred_fallthru
          _
      $region52: #{tpu_custom_call.1} parent=5 // pred_fallthru
        _
    $region6: #{tpu_custom_call.1} parent=1 // loop_footer
      %s21 = sadd.s32 1, %s17
    $region7: #{tpu_custom_call.1} parent=1 // loop_footer_branch
      %16 = sbr.rel target = $region3
    $region8: #{tpu_custom_call.1} parent=1 // loop_exit
      _
    %329 = vsyncpa [#allocation7], 1
    %s330 = scalar_lea.sflag [#allocation7], 1
    %331 = vsyncpa %s330, 1
    %332 = vsyncpa [#allocation10], 1
    %s333 = scalar_lea.sflag [#allocation10], 1
    %334 = vsyncpa %s333, 1
    %335 = vsyncpa [#allocation8], 1
    %s336 = scalar_lea.sflag [#allocation8], 1
    %337 = vsyncpa %s336, 1

</llo_original>
